<compile_context>
chip_gen: v7x
topology: tpu7x:2x2x1
jax: 0.10.0
libtpu: 0.0.40
codegen_flags: <defaults>
</compile_context>

<pallas_src>
import functools

import jax
import jax.numpy as jnp
from jax.experimental import pallas as pl
from jax.experimental.pallas import tpu as pltpu

GP = 128                 # padded lane width for each gate / hidden / decoder block
NGATES = 6               # r, z, n  for input path and hidden path
K_ROWS = 2 * GP          # contraction rows of the fused GRU matmul (onehot blk + hidden blk)
WDEC_ROW = K_ROWS        # blob row offset of the decoder weight block
BDEC_ROW = WDEC_ROW + GP  # blob row offset of the decoder bias row
BLOB_ROWS = BDEC_ROW + 8  # pad to a sublane multiple


def chatbot_step_kernel(ids_ref, h_ref, blob_ref, logp_ref, hout_ref, *, vocab_size):
    f32 = jnp.float32
    B = ids_ref.shape[0]

    # --- Fused LHS: [one-hot(token) + bias lane | padded hidden] -> (B, 256) ---
    # Lane `vocab_size` of the one-hot block is forced to 1; blob row
    # `vocab_size` carries all six GRU biases, so they ride the same matmul.
    iota = jax.lax.broadcasted_iota(jnp.int32, (B, GP), 1)
    ids = ids_ref[...]                                              # (B, 1) int32
    onehot = jnp.logical_or(iota == ids, iota == vocab_size).astype(f32)   # (B, GP)
    h = h_ref[...]                                                  # (B, GP), pad lanes are 0
    lhs = jnp.concatenate([onehot, h], axis=1)                      # (B, 2*GP)

    # --- Single MXU op for all six gate pre-activations (biases folded in) ---
    rhs = blob_ref[pl.ds(0, K_ROWS), :]                             # (256, 768)
    g = jnp.dot(lhs, rhs, preferred_element_type=f32)               # (B, 768)

    # Whole-vreg, lane-aligned gate slices (each gate padded to 128 lanes).
    gi_r = g[:, 0 * GP:1 * GP]
    gi_z = g[:, 1 * GP:2 * GP]
    gi_n = g[:, 2 * GP:3 * GP]
    gh_r = g[:, 3 * GP:4 * GP]
    gh_z = g[:, 4 * GP:5 * GP]
    gh_n = g[:, 5 * GP:6 * GP]

    r = jax.nn.sigmoid(gi_r + gh_r)
    z = jax.nn.sigmoid(gi_z + gh_z)
    n = jnp.tanh(gi_n + r * gh_n)
    # Pad lanes: gi/gh pads are exactly 0 -> r,z pad = 0.5, n pad = 0,
    # h pad = 0 -> h_new pad stays exactly 0 (safe to chain steps).
    h_new = (1.0 - z) * n + z * h                                   # (B, GP)

    # --- Decoder Linear (lane-dense, O padded to 128) + LogSoftmax -----------
    # Padded logit lanes carry bias -1e30 and zero weight columns, so the
    # max / sum-exp reductions ignore them; the wrapper slices them away.
    wdec = blob_ref[pl.ds(WDEC_ROW, GP), pl.ds(0, GP)]              # (GP, GP)
    bdec = blob_ref[pl.ds(BDEC_ROW, 1), pl.ds(0, GP)]               # (1, GP)
    logits = jnp.dot(h_new, wdec, preferred_element_type=f32) + bdec
    m = jnp.max(logits, axis=1, keepdims=True)
    shifted = logits - m
    lse = jnp.log(jnp.sum(jnp.exp(shifted), axis=1, keepdims=True))

    logp_ref[...] = shifted - lse
    hout_ref[...] = h_new


def pack_params(p):
    """Pack raw per-gate params into one kernel blob (done once, offline)."""
    emb = p["emb"]
    V, H = emb.shape
    O = p["wdec"].shape[1]
    # Bias-lane trick + single-block layout need everything inside one 128-lane block.
    assert V < GP and H <= GP and O <= GP, "toy-size layout; see TODO(synk) for tiling"
    f32 = jnp.float32
    hi = jax.lax.Precision.HIGHEST

    def top_blk(ew, b):          # rows 0:V = emb@Wi (input path), row V = bias
        blk = jnp.zeros((GP, GP), f32)
        if ew is not None:
            blk = blk.at[:V, :H].set(ew)
        return blk.at[V, :H].set(b.reshape(-1))

    def bot_blk(w):              # rows 0:H = Wh (hidden path)
        blk = jnp.zeros((GP, GP), f32)
        return blk if w is None else blk.at[:H, :H].set(w)

    def ew(w):                   # fuse embedding into the input-gate weight
        return jnp.dot(emb, w, precision=hi)

    top = jnp.concatenate([
        top_blk(ew(p["wir"]), p["bir"]),
        top_blk(ew(p["wiz"]), p["biz"]),
        top_blk(ew(p["win"]), p["bin"]),
        top_blk(None, p["bhr"]),
        top_blk(None, p["bhz"]),
        top_blk(None, p["bhn"]),
    ], axis=1)                                           # (GP, 6*GP)
    bot = jnp.concatenate([
        bot_blk(None), bot_blk(None), bot_blk(None),
        bot_blk(p["whr"]), bot_blk(p["whz"]), bot_blk(p["whn"]),
    ], axis=1)                                           # (GP, 6*GP)

    wdec_rows = jnp.zeros((GP, NGATES * GP), f32).at[:H, :O].set(p["wdec"])
    bdec_rows = jnp.zeros((8, NGATES * GP), f32)
    bdec_rows = bdec_rows.at[0, :O].set(p["bdec"].reshape(-1))
    if O < GP:
        bdec_rows = bdec_rows.at[0, O:GP].set(-1e30)     # kill padded logit lanes

    blob = jnp.concatenate([top, bot, wdec_rows, bdec_rows], axis=0)
    assert blob.shape == (BLOB_ROWS, NGATES * GP)
    return {"blob": blob, "vocab": V, "hidden": H, "out": O}


def chatbot_forward(token_ids, hidden, packed):
    blob = packed["blob"]
    V, H, O = packed["vocab"], packed["hidden"], packed["out"]
    B = token_ids.shape[0]

    ids2d = token_ids.astype(jnp.int32).reshape(B, 1)
    hpad = jnp.pad(hidden.astype(jnp.float32), ((0, 0), (0, GP - H)))   # lane-dense hidden

    vmem = pl.BlockSpec(memory_space=pltpu.MemorySpace.VMEM)
    kern = functools.partial(chatbot_step_kernel, vocab_size=V)
    logp_pad, h_pad = pl.pallas_call(
        kern,
        out_shape=(jax.ShapeDtypeStruct((B, GP), jnp.float32),
                   jax.ShapeDtypeStruct((B, GP), jnp.float32)),
        in_specs=[vmem, vmem, vmem],
        out_specs=(vmem, vmem),
        input_output_aliases={1: 1},     # hidden buffer reused for h_new
    )(ids2d, hpad, blob)

    return logp_pad[:, :O], h_pad[:, :H]


def init_params(key, input_size, hidden_size, output_size):
    """Deterministic PyTorch-style uniform(-1/sqrt(H), 1/sqrt(H)) init."""
    H, O = hidden_size, output_size
    bound = 1.0 / jnp.sqrt(jnp.float32(H))
    names_shapes = [
        ("emb",  (input_size, H)),
        ("wir",  (H, H)), ("wiz", (H, H)), ("win", (H, H)),
        ("whr",  (H, H)), ("whz", (H, H)), ("whn", (H, H)),
        ("bir",  (1, H)), ("biz", (1, H)), ("bin", (1, H)),
        ("bhr",  (1, H)), ("bhz", (1, H)), ("bhn", (1, H)),
        ("wdec", (H, O)), ("bdec", (1, O)),
    ]
    keys = jax.random.split(key, len(names_shapes))
    params = {}
    for (name, shape), k in zip(names_shapes, keys):
        params[name] = jax.random.uniform(
            k, shape, dtype=jnp.float32, minval=-bound, maxval=bound)
    return params


def reference_forward(token_ids, hidden, p):
    """Pure-JAX reference (mirrors torch.nn.GRU / Linear / LogSoftmax)."""
    x = jnp.take(p["emb"], token_ids, axis=0)
    h = hidden
    r = jax.nn.sigmoid(x @ p["wir"] + p["bir"] + h @ p["whr"] + p["bhr"])
    z = jax.nn.sigmoid(x @ p["wiz"] + p["biz"] + h @ p["whz"] + p["bhz"])
    n = jnp.tanh(x @ p["win"] + p["bin"] + r * (h @ p["whn"] + p["bhn"]))
    h_new = (1.0 - z) * n + z * h
    logits = h_new @ p["wdec"] + p["bdec"]
    return jax.nn.log_softmax(logits, axis=1), h_new


if __name__ == "__main__":
    INPUT_SIZE = 64    # vocab size for nn.Embedding
    HIDDEN = 32
    OUTPUT = 64
    B = 8              # number of tokens fed in one forward call

    key = jax.random.PRNGKey(0)
    pkey, tkey = jax.random.split(key)
    params = init_params(pkey, INPUT_SIZE, HIDDEN, OUTPUT)
    packed = pack_params(params)

    token_ids = jax.random.randint(tkey, (B,), 0, INPUT_SIZE, dtype=jnp.int32)
    hidden0 = jnp.zeros((B, HIDDEN), dtype=jnp.float32)   # init_hidden()

    logp, h_new = chatbot_forward(token_ids, hidden0, packed)
    logp = jax.block_until_ready(logp)
    h_new = jax.block_until_ready(h_new)

    # Correctness check against pure-JAX reference.
    ref_logp, ref_h = reference_forward(token_ids, hidden0, params)
    assert logp.shape == ref_logp.shape and h_new.shape == ref_h.shape
    assert jnp.allclose(logp, ref_logp, atol=3e-5, rtol=3e-5)
    assert jnp.allclose(h_new, ref_h, atol=3e-5, rtol=3e-5)

    print("KERNEL_OK")
</pallas_src>

<mosaic_0001>
module attributes {stable_mosaic.version = 11 : i64} {
  func.func @chatbot_step_kernel(%arg0: memref<8x1xi32, #tpu.memory_space<vmem>>, %arg1: memref<8x128xf32, #tpu.memory_space<vmem>>, %arg2: memref<392x768xf32, #tpu.memory_space<vmem>>, %arg3: memref<8x128xf32, #tpu.memory_space<vmem>>, %arg4: memref<8x128xf32, #tpu.memory_space<vmem>>) attributes {dimension_semantics = [], scalar_prefetch = 0 : i64, scratch_operands = 0 : i64, tpu.core_type = #tpu.core_type<tc>} {
    %0 = tpu.iota {dimensions = array<i32: 1>} : vector<8x128xi32>
    %c0 = arith.constant 0 : index
    %c0_0 = arith.constant 0 : index
    %1 = vector.load %arg0[%c0, %c0_0] : memref<8x1xi32, #tpu.memory_space<vmem>>, vector<8x1xi32>
    %2 = vector.broadcast %1 : vector<8x1xi32> to vector<8x128xi32>
    %3 = arith.cmpi eq, %0, %2 : vector<8x128xi32>
    %c64_i32 = arith.constant 64 : i32
    %4 = vector.broadcast %c64_i32 : i32 to vector<8x128xi32>
    %5 = arith.cmpi eq, %0, %4 : vector<8x128xi32>
    %6 = arith.ori %3, %5 : vector<8x128xi1>
    %7 = arith.extui %6 : vector<8x128xi1> to vector<8x128xi32>
    %8 = arith.sitofp %7 : vector<8x128xi32> to vector<8x128xf32>
    %c0_1 = arith.constant 0 : index
    %c0_2 = arith.constant 0 : index
    %9 = vector.load %arg1[%c0_1, %c0_2] : memref<8x128xf32, #tpu.memory_space<vmem>>, vector<8x128xf32>
    %10 = tpu.concatenate %8, %9 in 1 : vector<8x128xf32>, vector<8x128xf32> -> vector<8x256xf32>
    %c0_3 = arith.constant 0 : index
    %c0_4 = arith.constant 0 : index
    %11 = vector.load %arg2[%c0_3, %c0_4] : memref<392x768xf32, #tpu.memory_space<vmem>>, vector<256x768xf32>
    %cst = arith.constant dense<0.000000e+00> : vector<8x768xf32>
    %12 = tpu.matmul %10, %11, %cst {dimension_numbers = #tpu.dot_dimension_numbers<[1], [0], [0], [1], [0, 0, 1, 1], [], []>} : vector<8x256xf32>, vector<256x768xf32>, vector<8x768xf32> -> vector<8x768xf32>
    %13 = vector.extract_strided_slice %12 {offsets = [0, 0], sizes = [8, 128], strides = [1, 1]} : vector<8x768xf32> to vector<8x128xf32>
    %14 = vector.extract_strided_slice %12 {offsets = [0, 128], sizes = [8, 128], strides = [1, 1]} : vector<8x768xf32> to vector<8x128xf32>
    %15 = vector.extract_strided_slice %12 {offsets = [0, 256], sizes = [8, 128], strides = [1, 1]} : vector<8x768xf32> to vector<8x128xf32>
    %16 = vector.extract_strided_slice %12 {offsets = [0, 384], sizes = [8, 128], strides = [1, 1]} : vector<8x768xf32> to vector<8x128xf32>
    %17 = vector.extract_strided_slice %12 {offsets = [0, 512], sizes = [8, 128], strides = [1, 1]} : vector<8x768xf32> to vector<8x128xf32>
    %18 = vector.extract_strided_slice %12 {offsets = [0, 640], sizes = [8, 128], strides = [1, 1]} : vector<8x768xf32> to vector<8x128xf32>
    %19 = arith.addf %13, %16 : vector<8x128xf32>
    %20 = arith.negf %19 : vector<8x128xf32>
    %21 = math.exp %20 : vector<8x128xf32>
    %cst_5 = arith.constant 1.000000e+00 : f32
    %22 = vector.broadcast %cst_5 : f32 to vector<8x128xf32>
    %23 = arith.addf %22, %21 : vector<8x128xf32>
    %24 = arith.divf %22, %23 : vector<8x128xf32>
    %25 = arith.addf %14, %17 : vector<8x128xf32>
    %26 = arith.negf %25 : vector<8x128xf32>
    %27 = math.exp %26 : vector<8x128xf32>
    %cst_6 = arith.constant 1.000000e+00 : f32
    %28 = vector.broadcast %cst_6 : f32 to vector<8x128xf32>
    %29 = arith.addf %28, %27 : vector<8x128xf32>
    %30 = arith.divf %28, %29 : vector<8x128xf32>
    %31 = arith.mulf %24, %18 : vector<8x128xf32>
    %32 = arith.addf %15, %31 : vector<8x128xf32>
    %33 = math.tanh %32 : vector<8x128xf32>
    %cst_7 = arith.constant 1.000000e+00 : f32
    %34 = vector.broadcast %cst_7 : f32 to vector<8x128xf32>
    %35 = arith.subf %34, %30 : vector<8x128xf32>
    %36 = arith.mulf %35, %33 : vector<8x128xf32>
    %37 = arith.mulf %30, %9 : vector<8x128xf32>
    %38 = arith.addf %36, %37 : vector<8x128xf32>
    %c256 = arith.constant 256 : index
    %c0_8 = arith.constant 0 : index
    %39 = vector.load %arg2[%c256, %c0_8] : memref<392x768xf32, #tpu.memory_space<vmem>>, vector<128x128xf32>
    %c384 = arith.constant 384 : index
    %c0_9 = arith.constant 0 : index
    %40 = vector.load %arg2[%c384, %c0_9] : memref<392x768xf32, #tpu.memory_space<vmem>>, vector<1x128xf32>
    %cst_10 = arith.constant dense<0.000000e+00> : vector<8x128xf32>
    %41 = tpu.matmul %38, %39, %cst_10 {dimension_numbers = #tpu.dot_dimension_numbers<[1], [0], [0], [1], [0, 0, 1, 1], [], []>} : vector<8x128xf32>, vector<128x128xf32>, vector<8x128xf32> -> vector<8x128xf32>
    %42 = vector.broadcast %40 : vector<1x128xf32> to vector<8x128xf32>
    %43 = arith.addf %41, %42 : vector<8x128xf32>
    %cst_11 = arith.constant dense<0xFF800000> : vector<8xf32>
    %44 = vector.multi_reduction <maximumf>, %43, %cst_11 [1] : vector<8x128xf32> to vector<8xf32>
    %45 = vector.shape_cast %44 : vector<8xf32> to vector<8x1xf32>
    %46 = vector.broadcast %45 : vector<8x1xf32> to vector<8x128xf32>
    %47 = arith.subf %43, %46 : vector<8x128xf32>
    %48 = math.exp %47 : vector<8x128xf32>
    %cst_12 = arith.constant dense<0.000000e+00> : vector<8xf32>
    %49 = vector.multi_reduction <add>, %48, %cst_12 [1] : vector<8x128xf32> to vector<8xf32>
    %50 = vector.shape_cast %49 : vector<8xf32> to vector<8x1xf32>
    %51 = math.log %50 : vector<8x1xf32>
    %52 = vector.broadcast %51 : vector<8x1xf32> to vector<8x128xf32>
    %53 = arith.subf %47, %52 : vector<8x128xf32>
    %c0_13 = arith.constant 0 : index
    %c0_14 = arith.constant 0 : index
    %54 = vector.load %arg3[%c0_13, %c0_14] : memref<8x128xf32, #tpu.memory_space<vmem>>, vector<8x128xf32>
    tpu.vector_store %arg3[%c0_13, %c0_14], %53 {strides = array<i32>} : memref<8x128xf32, #tpu.memory_space<vmem>>, vector<8x128xf32>,
    %c0_15 = arith.constant 0 : index
    %c0_16 = arith.constant 0 : index
    %55 = vector.load %arg4[%c0_15, %c0_16] : memref<8x128xf32, #tpu.memory_space<vmem>>, vector<8x128xf32>
    tpu.vector_store %arg4[%c0_15, %c0_16], %38 {strides = array<i32>} : memref<8x128xf32, #tpu.memory_space<vmem>>, vector<8x128xf32>,
    return
  }
}

</mosaic_0001>

<llo_original>
// kernel: tpu_custom_call.1
$region0: #{tpu_custom_call.1}
  #allocation0 [shape = 'u32[]', space=smem, size = 0x4, offset = 0x4, fixed_abs, tag = 'smem constant byte address 0x4 - core index']
  #allocation1 [shape = 'u32[144,128]{1,0:T(1,128)}', space=vmem, size = 0x12000, scoped, tag = 'internal scratch']
  %s0 = inlined_call_operand.vmem [shape: s32[8,1], index: 0, kind: input, shape index: {}]
  %s1 = inlined_call_operand.hbm [shape: f32[8,128], index: 1, kind: input, shape index: {}, may-alias: {1,4}]
  %s2 = inlined_call_operand.hbm [shape: f32[392,768], index: 2, kind: input, shape index: {}]
  %s3 = inlined_call_operand.hbm [shape: f32[8,128], index: 3, kind: output, shape index: {0}]
  %s4 = inlined_call_operand.hbm [shape: f32[8,128], index: 4, kind: output, shape index: {1}, may-alias: {1,4}]
  %5 = xla_tuple %s3, %s4
  %s6 = sld [smem:[#allocation0]]
  $region38: #{tpu_custom_call.1} parent=0
    _
  %s8 = ssub.s32 1, %s6
  %s9 = scalar_select 0, %s8, %s6
  $region1: #{tpu_custom_call.1} parent=0
    #allocation2 [shape = 'u8[4096]{0}', space=vmem, size = 0x1000, scoped, tag = 'input window, operand 1, single buffered']
    #allocation3 [shape = 's32[1]{0}', space=sflag, size = 0x4, scoped, tag = 'scoped memory for tpu_custom_call.1']
    #allocation4 [shape = 's32[1]{0}', space=sflag, size = 0x4, scoped, tag = 'scoped memory for tpu_custom_call.1']
    #allocation5 [shape = 'u8[1204224]{0}', space=vmem, size = 0x126000, scoped, tag = 'input window, operand 2, single buffered']
    #allocation6 [shape = 's32[1]{0}', space=sflag, size = 0x4, scoped, tag = 'scoped memory for tpu_custom_call.1']
    #allocation7 [shape = 'u8[4096]{0}', space=vmem, size = 0x1000, scoped, tag = 'output window, operand 0, single buffered']
    #allocation8 [shape = 'u8[4096]{0}', space=vmem, size = 0x1000, scoped, tag = 'output window, operand 1, single buffered']
    #allocation9 [shape = 's32[1]{0}', space=sflag, size = 0x4, scoped, tag = 'scoped memory for tpu_custom_call.1']
    %10 = vsyncpa [#allocation3], 0
    %11 = vsyncpa [#allocation6], 0
    %12 = vsyncpa [#allocation4], 0
    %13 = vsyncpa [#allocation9], 0
    // Predicated region
    $region2: #{tpu_custom_call.1} parent=1 // pred_check
      _
    $region3: #{tpu_custom_call.1} parent=1 // pred_check_branch
      %15 = sbr.rel (0) target = $region5
    $region4: #{tpu_custom_call.1} parent=1 // pred_region
      _
    $region5: #{tpu_custom_call.1} parent=1 // pred_fallthru
      _
    // Predicated region
    $region6: #{tpu_custom_call.1} parent=1 // pred_check
      _
    $region7: #{tpu_custom_call.1} parent=1 // pred_check_branch
      %17 = sbr.rel (0) target = $region9
    $region8: #{tpu_custom_call.1} parent=1 // pred_region
      %s19 = ssub.s32 128, 128
      %20 = vsyncadd [#allocation3], %s19
      %s22 = sshll.u32 [#allocation2], 4
      %s23 = int_to_ptr.vmem [resolvable:$true] %s22
      %25 = dma.hbm_to_vmem [thread:$0]  %s1, 128, %s23, [#allocation3]
    $region9: #{tpu_custom_call.1} parent=1 // pred_fallthru
      _
    // Predicated region
    $region10: #{tpu_custom_call.1} parent=1 // pred_check
      _
    $region11: #{tpu_custom_call.1} parent=1 // pred_check_branch
      %27 = sbr.rel (0) target = $region13
    $region12: #{tpu_custom_call.1} parent=1 // pred_region
      %s29 = ssub.s32 37632, 37632
      %30 = vsyncadd [#allocation6], %s29
      %s31 = sshll.u32 [#allocation5], 4
      %s32 = int_to_ptr.vmem [resolvable:$true] %s31
      %37 = dma.hbm_to_vmem [thread:$0]  %s2, 37632, %s32, [#allocation6], 768, 768, 48
    $region13: #{tpu_custom_call.1} parent=1 // pred_fallthru
      _
    // Predicated region
    $region14: #{tpu_custom_call.1} parent=1 // pred_check
      _
    $region15: #{tpu_custom_call.1} parent=1 // pred_check_branch
      %39 = sbr.rel (0) target = $region17
    $region16: #{tpu_custom_call.1} parent=1 // pred_region
      %40 = dma.done [#allocation3], 128
    $region17: #{tpu_custom_call.1} parent=1 // pred_fallthru
      _
    // Predicated region
    $region18: #{tpu_custom_call.1} parent=1 // pred_check
      _
    $region19: #{tpu_custom_call.1} parent=1 // pred_check_branch
      %42 = sbr.rel (0) target = $region21
    $region20: #{tpu_custom_call.1} parent=1 // pred_region
      %43 = dma.done [#allocation6], 37632
    $region21: #{tpu_custom_call.1} parent=1 // pred_fallthru
      _
    %v44 = vlaneseq
    %v45 = vand.u32 %v44, 127
    %v46 = vld [vmem:[%s0] sm:$0xff]
    %47 = vset.pattern.permute.xlu0 0
    %48 = vperm.xlu0 %47, %v46
    %v49 = vpop.permute.xlu0 %48
    %vm50 = vcmp.eq.s32.totalorder %v45, %v49
    %vm51 = vcmp.eq.s32.totalorder %v45, 64
    %vm52 = vmor %vm50, %vm51
    %v53 = vsel %vm52, 1, 0
    %v54 = vcvt.s32.f32 %v53
    %v55 = vld [vmem:[#allocation2] sm:$0xff]
    %v56 = vld [vmem:[#allocation5] sm:$0xff]
    %v57 = vld [vmem:[#allocation5 + $0x8] sm:$0xff]
    %v58 = vld [vmem:[#allocation5 + $0x10] sm:$0xff]
    %v59 = vld [vmem:[#allocation5 + $0x18] sm:$0xff]
    %v60 = vld [vmem:[#allocation5 + $0x20] sm:$0xff]
    %v61 = vld [vmem:[#allocation5 + $0x28] sm:$0xff]
    %v62 = vld [vmem:[#allocation5 + $0x30] sm:$0xff]
    %v63 = vld [vmem:[#allocation5 + $0x38] sm:$0xff]
    %v64 = vld [vmem:[#allocation5 + $0x40] sm:$0xff]
    %v65 = vld [vmem:[#allocation5 + $0x48] sm:$0xff]
    %v66 = vld [vmem:[#allocation5 + $0x50] sm:$0xff]
    %v67 = vld [vmem:[#allocation5 + $0x58] sm:$0xff]
    %v68 = vld [vmem:[#allocation5 + $0x60] sm:$0xff]
    %v69 = vld [vmem:[#allocation5 + $0x68] sm:$0xff]
    %v70 = vld [vmem:[#allocation5 + $0x70] sm:$0xff]
    %v71 = vld [vmem:[#allocation5 + $0x78] sm:$0xff]
    %v72 = vld [vmem:[#allocation5 + $0x80] sm:$0xff]
    %v73 = vld [vmem:[#allocation5 + $0x88] sm:$0xff]
    %v74 = vld [vmem:[#allocation5 + $0x90] sm:$0xff]
    %v75 = vld [vmem:[#allocation5 + $0x98] sm:$0xff]
    %v76 = vld [vmem:[#allocation5 + $0xa0] sm:$0xff]
    %v77 = vld [vmem:[#allocation5 + $0xa8] sm:$0xff]
    %v78 = vld [vmem:[#allocation5 + $0xb0] sm:$0xff]
    %v79 = vld [vmem:[#allocation5 + $0xb8] sm:$0xff]
    %v80 = vld [vmem:[#allocation5 + $0xc0] sm:$0xff]
    %v81 = vld [vmem:[#allocation5 + $0xc8] sm:$0xff]
    %v82 = vld [vmem:[#allocation5 + $0xd0] sm:$0xff]
    %v83 = vld [vmem:[#allocation5 + $0xd8] sm:$0xff]
    %v84 = vld [vmem:[#allocation5 + $0xe0] sm:$0xff]
    %v85 = vld [vmem:[#allocation5 + $0xe8] sm:$0xff]
    %v86 = vld [vmem:[#allocation5 + $0xf0] sm:$0xff]
    %v87 = vld [vmem:[#allocation5 + $0xf8] sm:$0xff]
    %v88 = vld [vmem:[#allocation5 + $0x100] sm:$0xff]
    %v89 = vld [vmem:[#allocation5 + $0x108] sm:$0xff]
    %v90 = vld [vmem:[#allocation5 + $0x110] sm:$0xff]
    %v91 = vld [vmem:[#allocation5 + $0x118] sm:$0xff]
    %v92 = vld [vmem:[#allocation5 + $0x120] sm:$0xff]
    %v93 = vld [vmem:[#allocation5 + $0x128] sm:$0xff]
    %v94 = vld [vmem:[#allocation5 + $0x130] sm:$0xff]
    %v95 = vld [vmem:[#allocation5 + $0x138] sm:$0xff]
    %v96 = vld [vmem:[#allocation5 + $0x140] sm:$0xff]
    %v97 = vld [vmem:[#allocation5 + $0x148] sm:$0xff]
    %v98 = vld [vmem:[#allocation5 + $0x150] sm:$0xff]
    %v99 = vld [vmem:[#allocation5 + $0x158] sm:$0xff]
    %v100 = vld [vmem:[#allocation5 + $0x160] sm:$0xff]
    %v101 = vld [vmem:[#allocation5 + $0x168] sm:$0xff]
    %v102 = vld [vmem:[#allocation5 + $0x170] sm:$0xff]
    %v103 = vld [vmem:[#allocation5 + $0x178] sm:$0xff]
    %v104 = vld [vmem:[#allocation5 + $0x180] sm:$0xff]
    %v105 = vld [vmem:[#allocation5 + $0x188] sm:$0xff]
    %v106 = vld [vmem:[#allocation5 + $0x190] sm:$0xff]
    %v107 = vld [vmem:[#allocation5 + $0x198] sm:$0xff]
    %v108 = vld [vmem:[#allocation5 + $0x1a0] sm:$0xff]
    %v109 = vld [vmem:[#allocation5 + $0x1a8] sm:$0xff]
    %v110 = vld [vmem:[#allocation5 + $0x1b0] sm:$0xff]
    %v111 = vld [vmem:[#allocation5 + $0x1b8] sm:$0xff]
    %v112 = vld [vmem:[#allocation5 + $0x1c0] sm:$0xff]
    %v113 = vld [vmem:[#allocation5 + $0x1c8] sm:$0xff]
    %v114 = vld [vmem:[#allocation5 + $0x1d0] sm:$0xff]
    %v115 = vld [vmem:[#allocation5 + $0x1d8] sm:$0xff]
    %v116 = vld [vmem:[#allocation5 + $0x1e0] sm:$0xff]
    %v117 = vld [vmem:[#allocation5 + $0x1e8] sm:$0xff]
    %v118 = vld [vmem:[#allocation5 + $0x1f0] sm:$0xff]
    %v119 = vld [vmem:[#allocation5 + $0x1f8] sm:$0xff]
    %v120 = vld [vmem:[#allocation5 + $0x200] sm:$0xff]
    %v121 = vld [vmem:[#allocation5 + $0x208] sm:$0xff]
    %v122 = vld [vmem:[#allocation5 + $0x210] sm:$0xff]
    %v123 = vld [vmem:[#allocation5 + $0x218] sm:$0xff]
    %v124 = vld [vmem:[#allocation5 + $0x220] sm:$0xff]
    %v125 = vld [vmem:[#allocation5 + $0x228] sm:$0xff]
    %v126 = vld [vmem:[#allocation5 + $0x230] sm:$0xff]
    %v127 = vld [vmem:[#allocation5 + $0x238] sm:$0xff]
    %v128 = vld [vmem:[#allocation5 + $0x240] sm:$0xff]
    %v129 = vld [vmem:[#allocation5 + $0x248] sm:$0xff]
    %v130 = vld [vmem:[#allocation5 + $0x250] sm:$0xff]
    %v131 = vld [vmem:[#allocation5 + $0x258] sm:$0xff]
    %v132 = vld [vmem:[#allocation5 + $0x260] sm:$0xff]
    %v133 = vld [vmem:[#allocation5 + $0x268] sm:$0xff]
    %v134 = vld [vmem:[#allocation5 + $0x270] sm:$0xff]
    %v135 = vld [vmem:[#allocation5 + $0x278] sm:$0xff]
    %v136 = vld [vmem:[#allocation5 + $0x280] sm:$0xff]
    %v137 = vld [vmem:[#allocation5 + $0x288] sm:$0xff]
    %v138 = vld [vmem:[#allocation5 + $0x290] sm:$0xff]
    %v139 = vld [vmem:[#allocation5 + $0x298] sm:$0xff]
    %v140 = vld [vmem:[#allocation5 + $0x2a0] sm:$0xff]
    %v141 = vld [vmem:[#allocation5 + $0x2a8] sm:$0xff]
    %v142 = vld [vmem:[#allocation5 + $0x2b0] sm:$0xff]
    %v143 = vld [vmem:[#allocation5 + $0x2b8] sm:$0xff]
    %v144 = vld [vmem:[#allocation5 + $0x2c0] sm:$0xff]
    %v145 = vld [vmem:[#allocation5 + $0x2c8] sm:$0xff]
    %v146 = vld [vmem:[#allocation5 + $0x2d0] sm:$0xff]
    %v147 = vld [vmem:[#allocation5 + $0x2d8] sm:$0xff]
    %v148 = vld [vmem:[#allocation5 + $0x2e0] sm:$0xff]
    %v149 = vld [vmem:[#allocation5 + $0x2e8] sm:$0xff]
    %v150 = vld [vmem:[#allocation5 + $0x2f0] sm:$0xff]
    %v151 = vld [vmem:[#allocation5 + $0x2f8] sm:$0xff]
    %v152 = vld [vmem:[#allocation5 + $0x300] sm:$0xff]
    %v153 = vld [vmem:[#allocation5 + $0x308] sm:$0xff]
    %v154 = vld [vmem:[#allocation5 + $0x310] sm:$0xff]
    %v155 = vld [vmem:[#allocation5 + $0x318] sm:$0xff]
    %v156 = vld [vmem:[#allocation5 + $0x320] sm:$0xff]
    %v157 = vld [vmem:[#allocation5 + $0x328] sm:$0xff]
    %v158 = vld [vmem:[#allocation5 + $0x330] sm:$0xff]
    %v159 = vld [vmem:[#allocation5 + $0x338] sm:$0xff]
    %v160 = vld [vmem:[#allocation5 + $0x340] sm:$0xff]
    %v161 = vld [vmem:[#allocation5 + $0x348] sm:$0xff]
    %v162 = vld [vmem:[#allocation5 + $0x350] sm:$0xff]
    %v163 = vld [vmem:[#allocation5 + $0x358] sm:$0xff]
    %v164 = vld [vmem:[#allocation5 + $0x360] sm:$0xff]
    %v165 = vld [vmem:[#allocation5 + $0x368] sm:$0xff]
    %v166 = vld [vmem:[#allocation5 + $0x370] sm:$0xff]
    %v167 = vld [vmem:[#allocation5 + $0x378] sm:$0xff]
    %v168 = vld [vmem:[#allocation5 + $0x380] sm:$0xff]
    %v169 = vld [vmem:[#allocation5 + $0x388] sm:$0xff]
    %v170 = vld [vmem:[#allocation5 + $0x390] sm:$0xff]
    %v171 = vld [vmem:[#allocation5 + $0x398] sm:$0xff]
    %v172 = vld [vmem:[#allocation5 + $0x3a0] sm:$0xff]
    %v173 = vld [vmem:[#allocation5 + $0x3a8] sm:$0xff]
    %v174 = vld [vmem:[#allocation5 + $0x3b0] sm:$0xff]
    %v175 = vld [vmem:[#allocation5 + $0x3b8] sm:$0xff]
    %v176 = vld [vmem:[#allocation5 + $0x3c0] sm:$0xff]
    %v177 = vld [vmem:[#allocation5 + $0x3c8] sm:$0xff]
    %v178 = vld [vmem:[#allocation5 + $0x3d0] sm:$0xff]
    %v179 = vld [vmem:[#allocation5 + $0x3d8] sm:$0xff]
    %v180 = vld [vmem:[#allocation5 + $0x3e0] sm:$0xff]
    %v181 = vld [vmem:[#allocation5 + $0x3e8] sm:$0xff]
    %v182 = vld [vmem:[#allocation5 + $0x3f0] sm:$0xff]
    %v183 = vld [vmem:[#allocation5 + $0x3f8] sm:$0xff]
    %v184 = vld [vmem:[#allocation5 + $0x400] sm:$0xff]
    %v185 = vld [vmem:[#allocation5 + $0x408] sm:$0xff]
    %v186 = vld [vmem:[#allocation5 + $0x410] sm:$0xff]
    %v187 = vld [vmem:[#allocation5 + $0x418] sm:$0xff]
    %v188 = vld [vmem:[#allocation5 + $0x420] sm:$0xff]
    %v189 = vld [vmem:[#allocation5 + $0x428] sm:$0xff]
    %v190 = vld [vmem:[#allocation5 + $0x430] sm:$0xff]
    %v191 = vld [vmem:[#allocation5 + $0x438] sm:$0xff]
    %v192 = vld [vmem:[#allocation5 + $0x440] sm:$0xff]
    %v193 = vld [vmem:[#allocation5 + $0x448] sm:$0xff]
    %v194 = vld [vmem:[#allocation5 + $0x450] sm:$0xff]
    %v195 = vld [vmem:[#allocation5 + $0x458] sm:$0xff]
    %v196 = vld [vmem:[#allocation5 + $0x460] sm:$0xff]
    %v197 = vld [vmem:[#allocation5 + $0x468] sm:$0xff]
    %v198 = vld [vmem:[#allocation5 + $0x470] sm:$0xff]
    %v199 = vld [vmem:[#allocation5 + $0x478] sm:$0xff]
    %v200 = vld [vmem:[#allocation5 + $0x480] sm:$0xff]
    %v201 = vld [vmem:[#allocation5 + $0x488] sm:$0xff]
    %v202 = vld [vmem:[#allocation5 + $0x490] sm:$0xff]
    %v203 = vld [vmem:[#allocation5 + $0x498] sm:$0xff]
    %v204 = vld [vmem:[#allocation5 + $0x4a0] sm:$0xff]
    %v205 = vld [vmem:[#allocation5 + $0x4a8] sm:$0xff]
    %v206 = vld [vmem:[#allocation5 + $0x4b0] sm:$0xff]
    %v207 = vld [vmem:[#allocation5 + $0x4b8] sm:$0xff]
    %v208 = vld [vmem:[#allocation5 + $0x4c0] sm:$0xff]
    %v209 = vld [vmem:[#allocation5 + $0x4c8] sm:$0xff]
    %v210 = vld [vmem:[#allocation5 + $0x4d0] sm:$0xff]
    %v211 = vld [vmem:[#allocation5 + $0x4d8] sm:$0xff]
    %v212 = vld [vmem:[#allocation5 + $0x4e0] sm:$0xff]
    %v213 = vld [vmem:[#allocation5 + $0x4e8] sm:$0xff]
    %v214 = vld [vmem:[#allocation5 + $0x4f0] sm:$0xff]
    %v215 = vld [vmem:[#allocation5 + $0x4f8] sm:$0xff]
    %v216 = vld [vmem:[#allocation5 + $0x500] sm:$0xff]
    %v217 = vld [vmem:[#allocation5 + $0x508] sm:$0xff]
    %v218 = vld [vmem:[#allocation5 + $0x510] sm:$0xff]
    %v219 = vld [vmem:[#allocation5 + $0x518] sm:$0xff]
    %v220 = vld [vmem:[#allocation5 + $0x520] sm:$0xff]
    %v221 = vld [vmem:[#allocation5 + $0x528] sm:$0xff]
    %v222 = vld [vmem:[#allocation5 + $0x530] sm:$0xff]
    %v223 = vld [vmem:[#allocation5 + $0x538] sm:$0xff]
    %v224 = vld [vmem:[#allocation5 + $0x540] sm:$0xff]
    %v225 = vld [vmem:[#allocation5 + $0x548] sm:$0xff]
    %v226 = vld [vmem:[#allocation5 + $0x550] sm:$0xff]
    %v227 = vld [vmem:[#allocation5 + $0x558] sm:$0xff]
    %v228 = vld [vmem:[#allocation5 + $0x560] sm:$0xff]
    %v229 = vld [vmem:[#allocation5 + $0x568] sm:$0xff]
    %v230 = vld [vmem:[#allocation5 + $0x570] sm:$0xff]
    %v231 = vld [vmem:[#allocation5 + $0x578] sm:$0xff]
    %v232 = vld [vmem:[#allocation5 + $0x580] sm:$0xff]
    %v233 = vld [vmem:[#allocation5 + $0x588] sm:$0xff]
    %v234 = vld [vmem:[#allocation5 + $0x590] sm:$0xff]
    %v235 = vld [vmem:[#allocation5 + $0x598] sm:$0xff]
    %v236 = vld [vmem:[#allocation5 + $0x5a0] sm:$0xff]
    %v237 = vld [vmem:[#allocation5 + $0x5a8] sm:$0xff]
    %v238 = vld [vmem:[#allocation5 + $0x5b0] sm:$0xff]
    %v239 = vld [vmem:[#allocation5 + $0x5b8] sm:$0xff]
    %v240 = vld [vmem:[#allocation5 + $0x5c0] sm:$0xff]
    %v241 = vld [vmem:[#allocation5 + $0x5c8] sm:$0xff]
    %v242 = vld [vmem:[#allocation5 + $0x5d0] sm:$0xff]
    %v243 = vld [vmem:[#allocation5 + $0x5d8] sm:$0xff]
    %v244 = vld [vmem:[#allocation5 + $0x5e0] sm:$0xff]
    %v245 = vld [vmem:[#allocation5 + $0x5e8] sm:$0xff]
    %v246 = vld [vmem:[#allocation5 + $0x5f0] sm:$0xff]
    %v247 = vld [vmem:[#allocation5 + $0x5f8] sm:$0xff]
    %248 = vmatprep.subr.mxu0 %v57
    %249 = vmatpush1.msra.mxu0 %v56
    %250 = vmatprep.subr.mxu0 %v63
    %251 = vmatpush1.msra.mxu0 %v62
    %252 = vmatprep.subr.mxu0 %v69
    %253 = vmatpush1.msra.mxu0 %v68
    %254 = vmatprep.subr.mxu0 %v75
    %255 = vmatpush1.msra.mxu0 %v74
    %256 = vmatprep.subr.mxu0 %v81
    %257 = vmatpush1.msra.mxu0 %v80
    %258 = vmatprep.subr.mxu0 %v87
    %259 = vmatpush1.msra.mxu0 %v86
    %260 = vmatprep.subr.mxu0 %v93
    %261 = vmatpush1.msra.mxu0 %v92
    %262 = vmatprep.subr.mxu0 %v99
    %263 = vmatpush1.msra.mxu0 %v98
    %264 = vmatprep.subr.mxu0 %v105
    %265 = vmatpush1.msra.mxu0 %v104
    %266 = vmatprep.subr.mxu0 %v111
    %267 = vmatpush1.msra.mxu0 %v110
    %268 = vmatprep.subr.mxu0 %v117
    %269 = vmatpush1.msra.mxu0 %v116
    %270 = vmatprep.subr.mxu0 %v123
    %271 = vmatpush1.msra.mxu0 %v122
    %272 = vmatprep.subr.mxu0 %v129
    %273 = vmatpush1.msra.mxu0 %v128
    %274 = vmatprep.subr.mxu0 %v135
    %275 = vmatpush1.msra.mxu0 %v134
    %276 = vmatprep.subr.mxu0 %v141
    %277 = vmatpush1.msra.mxu0 %v140
    %278 = vmatprep.subr.mxu0 %v147
    %279 = vmatpush1.msra.mxu0 %v146
    %280 = vmatprep.subr.mxu0 %v153
    %281 = vmatpush1.msra.mxu0 %v152
    %282 = vmatprep.subr.mxu0 %v159
    %283 = vmatpush1.msra.mxu0 %v158
    %284 = vmatprep.subr.mxu0 %v165
    %285 = vmatpush1.msra.mxu0 %v164
    %286 = vmatprep.subr.mxu0 %v171
    %287 = vmatpush1.msra.mxu0 %v170
    %288 = vmatprep.subr.mxu0 %v177
    %289 = vmatpush1.msra.mxu0 %v176
    %290 = vmatprep.subr.mxu0 %v183
    %291 = vmatpush1.msra.mxu0 %v182
    %292 = vmatprep.subr.mxu0 %v189
    %293 = vmatpush1.msra.mxu0 %v188
    %294 = vmatprep.subr.mxu0 %v195
    %295 = vmatpush1.msra.mxu0 %v194
    %296 = vmatprep.subr.mxu0 %v201
    %297 = vmatpush1.msra.mxu0 %v200
    %298 = vmatprep.subr.mxu0 %v207
    %299 = vmatpush1.msra.mxu0 %v206
    %300 = vmatprep.subr.mxu0 %v213
    %301 = vmatpush1.msra.mxu0 %v212
    %302 = vmatprep.subr.mxu0 %v219
    %303 = vmatpush1.msra.mxu0 %v218
    %304 = vmatprep.subr.mxu0 %v225
    %305 = vmatpush1.msra.mxu0 %v224
    %306 = vmatprep.subr.mxu0 %v231
    %307 = vmatpush1.msra.mxu0 %v230
    %308 = vmatprep.subr.mxu0 %v237
    %309 = vmatpush1.msra.mxu0 %v236
    %310 = vmatprep.subr.mxu0 %v243
    %311 = vmatpush1.msra.mxu0 %v242
    %312 = vmatprep.mubr.f32.mxu0 %v55
    %313 = vmatmul.mubr.f32.gmra.mrb[0].mxu0 %v54
    %v314 = vpop.f32.mrb[0].mxu0
    %v315 = vadd.f32 0.0, %v314
    %v316 = vpop.f32.mrb[0].mxu0
    %v317 = vadd.f32 0.0, %v316
    %318 = vdwg.mxu0
    %319 = vmatprep.subr.mxu0 %v59
    %320 = vmatpush1.msra.mxu0 %v58
    %321 = vmatprep.subr.mxu0 %v65
    %322 = vmatpush1.msra.mxu0 %v64
    %323 = vmatprep.subr.mxu0 %v71
    %324 = vmatpush1.msra.mxu0 %v70
    %325 = vmatprep.subr.mxu0 %v77
    %326 = vmatpush1.msra.mxu0 %v76
    %327 = vmatprep.subr.mxu0 %v83
    %328 = vmatpush1.msra.mxu0 %v82
    %329 = vmatprep.subr.mxu0 %v89
    %330 = vmatpush1.msra.mxu0 %v88
    %331 = vmatprep.subr.mxu0 %v95
    %332 = vmatpush1.msra.mxu0 %v94
    %333 = vmatprep.subr.mxu0 %v101
    %334 = vmatpush1.msra.mxu0 %v100
    %335 = vmatprep.subr.mxu0 %v107
    %336 = vmatpush1.msra.mxu0 %v106
    %337 = vmatprep.subr.mxu0 %v113
    %338 = vmatpush1.msra.mxu0 %v112
    %339 = vmatprep.subr.mxu0 %v119
    %340 = vmatpush1.msra.mxu0 %v118
    %341 = vmatprep.subr.mxu0 %v125
    %342 = vmatpush1.msra.mxu0 %v124
    %343 = vmatprep.subr.mxu0 %v131
    %344 = vmatpush1.msra.mxu0 %v130
    %345 = vmatprep.subr.mxu0 %v137
    %346 = vmatpush1.msra.mxu0 %v136
    %347 = vmatprep.subr.mxu0 %v143
    %348 = vmatpush1.msra.mxu0 %v142
    %349 = vmatprep.subr.mxu0 %v149
    %350 = vmatpush1.msra.mxu0 %v148
    %351 = vmatprep.subr.mxu0 %v155
    %352 = vmatpush1.msra.mxu0 %v154
    %353 = vmatprep.subr.mxu0 %v161
    %354 = vmatpush1.msra.mxu0 %v160
    %355 = vmatprep.subr.mxu0 %v167
    %356 = vmatpush1.msra.mxu0 %v166
    %357 = vmatprep.subr.mxu0 %v173
    %358 = vmatpush1.msra.mxu0 %v172
    %359 = vmatprep.subr.mxu0 %v179
    %360 = vmatpush1.msra.mxu0 %v178
    %361 = vmatprep.subr.mxu0 %v185
    %362 = vmatpush1.msra.mxu0 %v184
    %363 = vmatprep.subr.mxu0 %v191
    %364 = vmatpush1.msra.mxu0 %v190
    %365 = vmatprep.subr.mxu0 %v197
    %366 = vmatpush1.msra.mxu0 %v196
    %367 = vmatprep.subr.mxu0 %v203
    %368 = vmatpush1.msra.mxu0 %v202
    %369 = vmatprep.subr.mxu0 %v209
    %370 = vmatpush1.msra.mxu0 %v208
    %371 = vmatprep.subr.mxu0 %v215
    %372 = vmatpush1.msra.mxu0 %v214
    %373 = vmatprep.subr.mxu0 %v221
    %374 = vmatpush1.msra.mxu0 %v220
    %375 = vmatprep.subr.mxu0 %v227
    %376 = vmatpush1.msra.mxu0 %v226
    %377 = vmatprep.subr.mxu0 %v233
    %378 = vmatpush1.msra.mxu0 %v232
    %379 = vmatprep.subr.mxu0 %v239
    %380 = vmatpush1.msra.mxu0 %v238
    %381 = vmatprep.subr.mxu0 %v245
    %382 = vmatpush1.msra.mxu0 %v244
    %383 = vmatprep.mubr.f32.mxu0 %v55
    %384 = vmatmul.mubr.f32.gmra.mrb[0].mxu0 %v54
    %v385 = vpop.f32.mrb[0].mxu0
    %v386 = vadd.f32 0.0, %v385
    %v387 = vpop.f32.mrb[0].mxu0
    %v388 = vadd.f32 0.0, %v387
    %389 = vdwg.mxu0
    %390 = vmatprep.subr.mxu0 %v61
    %391 = vmatpush1.msra.mxu0 %v60
    %392 = vmatprep.subr.mxu0 %v67
    %393 = vmatpush1.msra.mxu0 %v66
    %394 = vmatprep.subr.mxu0 %v73
    %395 = vmatpush1.msra.mxu0 %v72
    %396 = vmatprep.subr.mxu0 %v79
    %397 = vmatpush1.msra.mxu0 %v78
    %398 = vmatprep.subr.mxu0 %v85
    %399 = vmatpush1.msra.mxu0 %v84
    %400 = vmatprep.subr.mxu0 %v91
    %401 = vmatpush1.msra.mxu0 %v90
    %402 = vmatprep.subr.mxu0 %v97
    %403 = vmatpush1.msra.mxu0 %v96
    %404 = vmatprep.subr.mxu0 %v103
    %405 = vmatpush1.msra.mxu0 %v102
    %406 = vmatprep.subr.mxu0 %v109
    %407 = vmatpush1.msra.mxu0 %v108
    %408 = vmatprep.subr.mxu0 %v115
    %409 = vmatpush1.msra.mxu0 %v114
    %410 = vmatprep.subr.mxu0 %v121
    %411 = vmatpush1.msra.mxu0 %v120
    %412 = vmatprep.subr.mxu0 %v127
    %413 = vmatpush1.msra.mxu0 %v126
    %414 = vmatprep.subr.mxu0 %v133
    %415 = vmatpush1.msra.mxu0 %v132
    %416 = vmatprep.subr.mxu0 %v139
    %417 = vmatpush1.msra.mxu0 %v138
    %418 = vmatprep.subr.mxu0 %v145
    %419 = vmatpush1.msra.mxu0 %v144
    %420 = vmatprep.subr.mxu0 %v151
    %421 = vmatpush1.msra.mxu0 %v150
    %422 = vmatprep.subr.mxu0 %v157
    %423 = vmatpush1.msra.mxu0 %v156
    %424 = vmatprep.subr.mxu0 %v163
    %425 = vmatpush1.msra.mxu0 %v162
    %426 = vmatprep.subr.mxu0 %v169
    %427 = vmatpush1.msra.mxu0 %v168
    %428 = vmatprep.subr.mxu0 %v175
    %429 = vmatpush1.msra.mxu0 %v174
    %430 = vmatprep.subr.mxu0 %v181
    %431 = vmatpush1.msra.mxu0 %v180
    %432 = vmatprep.subr.mxu0 %v187
    %433 = vmatpush1.msra.mxu0 %v186
    %434 = vmatprep.subr.mxu0 %v193
    %435 = vmatpush1.msra.mxu0 %v192
    %436 = vmatprep.subr.mxu0 %v199
    %437 = vmatpush1.msra.mxu0 %v198
    %438 = vmatprep.subr.mxu0 %v205
    %439 = vmatpush1.msra.mxu0 %v204
    %440 = vmatprep.subr.mxu0 %v211
    %441 = vmatpush1.msra.mxu0 %v210
    %442 = vmatprep.subr.mxu0 %v217
    %443 = vmatpush1.msra.mxu0 %v216
    %444 = vmatprep.subr.mxu0 %v223
    %445 = vmatpush1.msra.mxu0 %v222
    %446 = vmatprep.subr.mxu0 %v229
    %447 = vmatpush1.msra.mxu0 %v228
    %448 = vmatprep.subr.mxu0 %v235
    %449 = vmatpush1.msra.mxu0 %v234
    %450 = vmatprep.subr.mxu0 %v241
    %451 = vmatpush1.msra.mxu0 %v240
    %452 = vmatprep.subr.mxu0 %v247
    %453 = vmatpush1.msra.mxu0 %v246
    %454 = vmatprep.mubr.f32.mxu0 %v55
    %455 = vmatmul.mubr.f32.gmra.mrb[0].mxu0 %v54
    %v456 = vpop.f32.mrb[0].mxu0
    %v457 = vadd.f32 0.0, %v456
    %v458 = vpop.f32.mrb[0].mxu0
    %v459 = vadd.f32 0.0, %v458
    %460 = vdwg.mxu0
    %v461 = vadd.f32 %v315, %v388
    %v462 = vxor.u32 %v461, 2147483648
    %v463 = vmul.f32 %v462, 1.442695
    %v464 = vpow.pop %v463
    %v465 = vadd.f32 %v464, 1.0
    %v466 = vrcp.pop %v465
    %v467 = vmul.f32 1.0, %v466
    %v468 = vadd.f32 %v317, %v457
    %v469 = vxor.u32 %v468, 2147483648
    %v470 = vmul.f32 %v469, 1.442695
    %v471 = vpow.pop %v470
    %v472 = vadd.f32 %v471, 1.0
    %v473 = vrcp.pop %v472
    %v474 = vmul.f32 1.0, %v473
    %v475 = vmul.f32 %v467, %v459
    %v476 = vadd.f32 %v386, %v475
    %v477 = vtanh.pop %v476
    %v478 = vsub.f32 1.0, %v474
    %v479 = vmul.f32 %v478, %v477
    %v480 = vmul.f32 %v474, %v55
    %v481 = vadd.f32 %v479, %v480
    %v482 = vld [vmem:[#allocation5 + $0x600] sm:$0xff]
    %v483 = vld [vmem:[#allocation5 + $0x630] sm:$0xff]
    %v484 = vld [vmem:[#allocation5 + $0x660] sm:$0xff]
    %v485 = vld [vmem:[#allocation5 + $0x690] sm:$0xff]
    %v486 = vld [vmem:[#allocation5 + $0x6c0] sm:$0xff]
    %v487 = vld [vmem:[#allocation5 + $0x6f0] sm:$0xff]
    %v488 = vld [vmem:[#allocation5 + $0x720] sm:$0xff]
    %v489 = vld [vmem:[#allocation5 + $0x750] sm:$0xff]
    %v490 = vld [vmem:[#allocation5 + $0x780] sm:$0xff]
    %v491 = vld [vmem:[#allocation5 + $0x7b0] sm:$0xff]
    %v492 = vld [vmem:[#allocation5 + $0x7e0] sm:$0xff]
    %v493 = vld [vmem:[#allocation5 + $0x810] sm:$0xff]
    %v494 = vld [vmem:[#allocation5 + $0x840] sm:$0xff]
    %v495 = vld [vmem:[#allocation5 + $0x870] sm:$0xff]
    %v496 = vld [vmem:[#allocation5 + $0x8a0] sm:$0xff]
    %v497 = vld [vmem:[#allocation5 + $0x8d0] sm:$0xff]
    %v498 = vld [vmem:[#allocation5 + $0x900] ss:$0 sm:$0xff]
    %499 = vmatprep.subr.mxu0 0.0
    %500 = vmatpush1.msra.mxu0 %v482
    %501 = vmatprep.subr.mxu0 0.0
    %502 = vmatpush1.msra.mxu0 %v483
    %503 = vmatprep.subr.mxu0 0.0
    %504 = vmatpush1.msra.mxu0 %v484
    %505 = vmatprep.subr.mxu0 0.0
    %506 = vmatpush1.msra.mxu0 %v485
    %507 = vmatprep.subr.mxu0 0.0
    %508 = vmatpush1.msra.mxu0 %v486
    %509 = vmatprep.subr.mxu0 0.0
    %510 = vmatpush1.msra.mxu0 %v487
    %511 = vmatprep.subr.mxu0 0.0
    %512 = vmatpush1.msra.mxu0 %v488
    %513 = vmatprep.subr.mxu0 0.0
    %514 = vmatpush1.msra.mxu0 %v489
    %515 = vmatprep.subr.mxu0 0.0
    %516 = vmatpush1.msra.mxu0 %v490
    %517 = vmatprep.subr.mxu0 0.0
    %518 = vmatpush1.msra.mxu0 %v491
    %519 = vmatprep.subr.mxu0 0.0
    %520 = vmatpush1.msra.mxu0 %v492
    %521 = vmatprep.subr.mxu0 0.0
    %522 = vmatpush1.msra.mxu0 %v493
    %523 = vmatprep.subr.mxu0 0.0
    %524 = vmatpush1.msra.mxu0 %v494
    %525 = vmatprep.subr.mxu0 0.0
    %526 = vmatpush1.msra.mxu0 %v495
    %527 = vmatprep.subr.mxu0 0.0
    %528 = vmatpush1.msra.mxu0 %v496
    %529 = vmatprep.subr.mxu0 0.0
    %530 = vmatpush1.msra.mxu0 %v497
    %531 = vmatprep.subr.mxu0 0.0
    %532 = vmatpush1.msra.mxu0 0.0
    %533 = vmatprep.subr.mxu0 0.0
    %534 = vmatpush1.msra.mxu0 0.0
    %535 = vmatprep.subr.mxu0 0.0
    %536 = vmatpush1.msra.mxu0 0.0
    %537 = vmatprep.subr.mxu0 0.0
    %538 = vmatpush1.msra.mxu0 0.0
    %539 = vmatprep.subr.mxu0 0.0
    %540 = vmatpush1.msra.mxu0 0.0
    %541 = vmatprep.subr.mxu0 0.0
    %542 = vmatpush1.msra.mxu0 0.0
    %543 = vmatprep.subr.mxu0 0.0
    %544 = vmatpush1.msra.mxu0 0.0
    %545 = vmatprep.subr.mxu0 0.0
    %546 = vmatpush1.msra.mxu0 0.0
    %547 = vmatprep.subr.mxu0 0.0
    %548 = vmatpush1.msra.mxu0 0.0
    %549 = vmatprep.subr.mxu0 0.0
    %550 = vmatpush1.msra.mxu0 0.0
    %551 = vmatprep.subr.mxu0 0.0
    %552 = vmatpush1.msra.mxu0 0.0
    %553 = vmatprep.subr.mxu0 0.0
    %554 = vmatpush1.msra.mxu0 0.0
    %555 = vmatprep.subr.mxu0 0.0
    %556 = vmatpush1.msra.mxu0 0.0
    %557 = vmatprep.subr.mxu0 0.0
    %558 = vmatpush1.msra.mxu0 0.0
    %559 = vmatprep.subr.mxu0 0.0
    %560 = vmatpush1.msra.mxu0 0.0
    %561 = vmatprep.subr.mxu0 0.0
    %562 = vmatpush1.msra.mxu0 0.0
    %563 = vmatprep.mubr.f32.mxu0 0.0
    %564 = vmatmul.mubr.f32.gmra.mrb[0].mxu0 %v481
    %v565 = vpop.f32.mrb[0].mxu0
    %v566 = vadd.f32 %v498, %v565
    %v567 = vpop.f32.mrb[0].mxu0
    %568 = vdwg.mxu0
    %569 = vmax.xlane.f32.xlu0 %v566
    %v570 = vpop.xlane.xlu0 %569
    %v571 = vsub.f32 %v566, %v570
    %v572 = vmul.f32 %v571, 1.442695
    %v573 = vpow.pop %v572
    %574 = vadd.xlane.f32.xlu0 %v573
    %v575 = vpop.xlane.xlu0 %574
    %v576 = vlog2.pop %v575
    %v577 = vmul.f32 %v576, 0.6931472
    %v578 = vsub.f32 %v571, %v577
    %579 = vst [vmem:[#allocation7] sm:$0xff] %v578
    %580 = vst [vmem:[#allocation8] sm:$0xff] %v481
    // Predicated region
    $region22: #{tpu_custom_call.1} parent=1 // pred_check
      _
    $region23: #{tpu_custom_call.1} parent=1 // pred_check_branch
      %582 = sbr.rel (0) target = $region25
    $region24: #{tpu_custom_call.1} parent=1 // pred_region
      %s584 = ssub.s32 128, 128
      %585 = vsyncadd [#allocation4], %s584
      %s587 = sshll.u32 [#allocation7], 4
      %s588 = int_to_ptr.vmem [resolvable:$true] %s587
      %590 = dma.vmem_to_hbm [thread:$0]  %s588, 128, %s3, [#allocation4]
    $region25: #{tpu_custom_call.1} parent=1 // pred_fallthru
      _
    // Predicated region
    $region26: #{tpu_custom_call.1} parent=1 // pred_check
      _
    $region27: #{tpu_custom_call.1} parent=1 // pred_check_branch
      %592 = sbr.rel (0) target = $region29
    $region28: #{tpu_custom_call.1} parent=1 // pred_region
      %s594 = ssub.s32 128, 128
      %595 = vsyncadd [#allocation9], %s594
      %s597 = sshll.u32 [#allocation8], 4
      %s598 = int_to_ptr.vmem [resolvable:$true] %s597
      %600 = dma.vmem_to_hbm [thread:$0]  %s598, 128, %s4, [#allocation9]
    $region29: #{tpu_custom_call.1} parent=1 // pred_fallthru
      _
    // Predicated region
    $region30: #{tpu_custom_call.1} parent=1 // pred_check
      _
    $region31: #{tpu_custom_call.1} parent=1 // pred_check_branch
      %602 = sbr.rel (0) target = $region33
    $region32: #{tpu_custom_call.1} parent=1 // pred_region
      %603 = dma.done [#allocation4], 128
    $region33: #{tpu_custom_call.1} parent=1 // pred_fallthru
      _
    // Predicated region
    $region34: #{tpu_custom_call.1} parent=1 // pred_check
      _
    $region35: #{tpu_custom_call.1} parent=1 // pred_check_branch
      %605 = sbr.rel (0) target = $region37
    $region36: #{tpu_custom_call.1} parent=1 // pred_region
      %606 = dma.done [#allocation9], 128
    $region37: #{tpu_custom_call.1} parent=1 // pred_fallthru
      _
    %607 = vsyncpa [#allocation3], 1
    %608 = vsyncpa [#allocation6], 1
    %609 = vsyncpa [#allocation4], 1
    %610 = vsyncpa [#allocation9], 1

</llo_original>
